<compile_context>
chip_gen: v7x
topology: tpu7x:2x2x1
jax: 0.10.0
libtpu: 0.0.40
codegen_flags: <defaults>
</compile_context>

<pallas_src>
import jax
import jax.numpy as jnp
from jax import lax
from jax.experimental import pallas as pl
from jax.experimental.pallas import tpu as pltpu


def _round_up(x: int, m: int) -> int:
    return ((x + m - 1) // m) * m


def _copy_tile_kernel(x_ref, o_ref):
    # Full-tile copy. The chomp lives in the grid/out_shape, so this store is
    # lane-dense (unmasked) for every tile except the ragged edge tile.
    o_ref[...] = x_ref[...]


# Below this output size a Pallas launch is pure fixed overhead; let XLA slice.
_SMALL_BYTES = 1 << 20


def chomp1d_pallas(x, chomp_size: int, *, force_pallas: bool = False):
    """Pallas equivalent of Chomp1d.forward: x[:, :, :-chomp_size] (contiguous)."""
    if chomp_size <= 0:
        return x
    B, C, L = x.shape
    L_out = L - chomp_size
    if L_out <= 0:
        # PyTorch's x[:, :, :-chomp] with chomp >= L is an empty tensor.
        return x[:, :, :0]

    R = B * C
    itemsize = jnp.dtype(x.dtype).itemsize
    out_bytes = R * L_out * itemsize

    if out_bytes < _SMALL_BYTES and not force_pallas:
        # Tiny chomp: single fused XLA slice is strictly cheaper than a kernel.
        return lax.slice_in_dim(x, 0, L_out, axis=2)

    # Flatten (B, C) onto the sublane axis; lane axis = length (chomped dim).
    x2 = x.reshape(R, L)

    # Row tile: multiple of the dtype's sublane packing (8 f32 / 16 bf16 / 32 i8).
    # Lane tile: multiple of 128 so stores are full unmasked vst.
    row_pack = {4: 8, 2: 16, 1: 32}.get(itemsize, 8)
    tr = min(512, _round_up(R, row_pack))
    tl = min(1024, _round_up(L_out, 128))

    grid = (pl.cdiv(R, tr), pl.cdiv(L_out, tl))

    # 2 block-buffers each for input and output (double-buffered pipeline) + slack.
    block_bytes = tr * tl * itemsize
    vmem_bytes = min(max(4 * block_bytes + (2 << 20), 16 << 20), 100 << 20)

    out2 = pl.pallas_call(
        _copy_tile_kernel,
        out_shape=jax.ShapeDtypeStruct((R, L_out), x.dtype),
        grid=grid,
        in_specs=[pl.BlockSpec((tr, tl), lambda i, j: (i, j))],
        out_specs=pl.BlockSpec((tr, tl), lambda i, j: (i, j)),
        compiler_params=pltpu.CompilerParams(
            dimension_semantics=("parallel", "parallel"),
            vmem_limit_bytes=vmem_bytes,
        ),
        cost_estimate=pl.CostEstimate(
            flops=0, transcendentals=0, bytes_accessed=2 * out_bytes),
    )(x2)

    return out2.reshape(B, C, L_out)


def chomp1d_reference(x, chomp_size: int):
    if chomp_size <= 0:
        return x
    return x[:, :, :-chomp_size]


if __name__ == "__main__":
    key = jax.random.PRNGKey(0)

    # Small shapes consistent with a TCN-style use of Chomp1d:
    # batch=2, channels=4, length=16, chomp_size=2 (kernel_size=3, dilation=1).
    B, C, L = 2, 4, 16
    CHOMP = 2

    x = jax.random.normal(key, (B, C, L), jnp.float32)
    ref = chomp1d_reference(x, CHOMP)

    # 1) Exercise the Pallas kernel itself (forced, since this shape is tiny).
    out = jax.block_until_ready(chomp1d_pallas(x, CHOMP, force_pallas=True))
    assert out.shape == (B, C, L - CHOMP), out.shape
    assert bool(jnp.all(jnp.isfinite(out)))
    assert bool(jnp.array_equal(out, ref)), (out, ref)

    # 2) Default dispatch (short-circuits to an XLA slice at this size).
    out_small = jax.block_until_ready(chomp1d_pallas(x, CHOMP))
    assert bool(jnp.array_equal(out_small, ref))

    # 3) chomp_size == 0 identity path.
    out0 = jax.block_until_ready(chomp1d_pallas(x, 0))
    assert bool(jnp.array_equal(out0, x))

    # 4) bf16 case with a multi-tile lane grid and a ragged last tile,
    #    exercising the tiled Pallas path (rows=32, L_out=1496 -> 2 lane tiles).
    B2, C2, L2, CH2 = 2, 16, 1500, 4
    xb = jax.random.normal(
        jax.random.PRNGKey(1), (B2, C2, L2), jnp.float32).astype(jnp.bfloat16)
    outb = jax.block_until_ready(chomp1d_pallas(xb, CH2, force_pallas=True))
    assert outb.shape == (B2, C2, L2 - CH2)
    assert bool(jnp.array_equal(outb, xb[:, :, :-CH2]))

    print("KERNEL_OK")
</pallas_src>

<mosaic_0001>
module attributes {stable_mosaic.version = 11 : i64} {
  func.func @_copy_tile_kernel(%arg0: i32, %arg1: i32, %arg2: memref<8x128xf32, #tpu.memory_space<vmem>>, %arg3: memref<8x128xf32, #tpu.memory_space<vmem>>) attributes {dimension_semantics = [#tpu.dimension_semantics<parallel>, #tpu.dimension_semantics<parallel>], iteration_bounds = array<i64: 1, 1>, scalar_prefetch = 0 : i64, scratch_operands = 0 : i64, tpu.core_type = #tpu.core_type<tc>, window_params = [{transform_indices = @transform_0, window_bounds = array<i64: 8, 128>}, {transform_indices = @transform_1, window_bounds = array<i64: 8, 128>}]} {
    %c0 = arith.constant 0 : index
    %c0_0 = arith.constant 0 : index
    %0 = vector.load %arg2[%c0, %c0_0] : memref<8x128xf32, #tpu.memory_space<vmem>>, vector<8x128xf32>
    %c0_1 = arith.constant 0 : index
    %c0_2 = arith.constant 0 : index
    %1 = vector.load %arg3[%c0_1, %c0_2] : memref<8x128xf32, #tpu.memory_space<vmem>>, vector<8x128xf32>
    tpu.vector_store %arg3[%c0_1, %c0_2], %0 {strides = array<i32>} : memref<8x128xf32, #tpu.memory_space<vmem>>, vector<8x128xf32>,
    return
  }
  func.func @transform_0(%arg0: i32, %arg1: i32) -> (i32, i32) {
    %c0_i32 = arith.constant 0 : i32
    return %arg0, %arg1 : i32, i32
  }
  func.func @transform_1(%arg0: i32, %arg1: i32) -> (i32, i32) {
    %c0_i32 = arith.constant 0 : i32
    return %arg0, %arg1 : i32, i32
  }
}

</mosaic_0001>

<llo_original>
// kernel: tpu_custom_call.1
$region0: #{tpu_custom_call.1}
  #allocation0 [shape = 'u32[]', space=smem, size = 0x4, offset = 0x4, fixed_abs, tag = 'smem constant byte address 0x4 - core index']
  #allocation1 [shape = 'u32[144,128]{1,0:T(1,128)}', space=vmem, size = 0x12000, scoped, tag = 'internal scratch']
  %s0 = inlined_call_operand.hbm [shape: f32[8,16], index: 0, kind: input, shape index: {}]
  %s1 = inlined_call_operand.hbm [shape: f32[8,14], index: 1, kind: output, shape index: {}]
  %s2 = sld [smem:[#allocation0]]
  $region18: #{tpu_custom_call.1} parent=0
    _
  %s4 = ssub.s32 1, %s2
  %s5 = scalar_select 0, %s4, %s2
  $region1: #{tpu_custom_call.1} parent=0
    #allocation2 [shape = 'u8[4096]{0}', space=vmem, size = 0x1000, scoped, tag = 'input window, operand 0, single buffered']
    #allocation3 [shape = 's32[1]{0}', space=sflag, size = 0x4, scoped, tag = 'scoped memory for tpu_custom_call.1']
    #allocation4 [shape = 's32[1]{0}', space=sflag, size = 0x4, scoped, tag = 'scoped memory for tpu_custom_call.1']
    #allocation5 [shape = 'u8[4096]{0}', space=vmem, size = 0x1000, scoped, tag = 'output window, operand 0, single buffered']
    %6 = vsyncpa [#allocation3], 0
    %7 = vsyncpa [#allocation4], 0
    // Predicated region
    $region2: #{tpu_custom_call.1} parent=1 // pred_check
      _
    $region3: #{tpu_custom_call.1} parent=1 // pred_check_branch
      %9 = sbr.rel (0) target = $region5
    $region4: #{tpu_custom_call.1} parent=1 // pred_region
      %s11 = ssub.s32 128, 128
      %12 = vsyncadd [#allocation3], %s11
      %s14 = sshll.u32 [#allocation2], 4
      %s15 = int_to_ptr.vmem [resolvable:$true] %s14
      %17 = dma.hbm_to_vmem [thread:$0]  %s0, 128, %s15, [#allocation3]
    $region5: #{tpu_custom_call.1} parent=1 // pred_fallthru
      _
    // Predicated region
    $region6: #{tpu_custom_call.1} parent=1 // pred_check
      _
    $region7: #{tpu_custom_call.1} parent=1 // pred_check_branch
      %19 = sbr.rel (0) target = $region9
    $region8: #{tpu_custom_call.1} parent=1 // pred_region
      %20 = dma.done [#allocation3], 128
    $region9: #{tpu_custom_call.1} parent=1 // pred_fallthru
      _
    %v21 = vld [vmem:[#allocation2] sm:$0xff]
    %22 = vst [vmem:[#allocation5] sm:$0xff] %v21
    // Predicated region
    $region10: #{tpu_custom_call.1} parent=1 // pred_check
      _
    $region11: #{tpu_custom_call.1} parent=1 // pred_check_branch
      %24 = sbr.rel (0) target = $region13
    $region12: #{tpu_custom_call.1} parent=1 // pred_region
      %s26 = ssub.s32 128, 128
      %27 = vsyncadd [#allocation4], %s26
      %s29 = sshll.u32 [#allocation5], 4
      %s30 = int_to_ptr.vmem [resolvable:$true] %s29
      %32 = dma.vmem_to_hbm [thread:$0]  %s30, 128, %s1, [#allocation4]
    $region13: #{tpu_custom_call.1} parent=1 // pred_fallthru
      _
    // Predicated region
    $region14: #{tpu_custom_call.1} parent=1 // pred_check
      _
    $region15: #{tpu_custom_call.1} parent=1 // pred_check_branch
      %34 = sbr.rel (0) target = $region17
    $region16: #{tpu_custom_call.1} parent=1 // pred_region
      %35 = dma.done [#allocation4], 128
    $region17: #{tpu_custom_call.1} parent=1 // pred_fallthru
      _
    %36 = vsyncpa [#allocation3], 1
    %37 = vsyncpa [#allocation4], 1

</llo_original>
